<compile_context>
chip_gen: v7x
topology: tpu7x:2x2x1
jax: 0.10.0
libtpu: 0.0.40
codegen_flags: <defaults>
</compile_context>

<pallas_src>
import jax
import jax.numpy as jnp
from jax import lax
from jax.experimental import pallas as pl
from jax.experimental.pallas import tpu as pltpu

NUMBER_CARS = 34   # cfg.MODEL.NUMBER_CARS
ROT_DIM = 4        # 4 (not 4 * NUMBER_CARS) since CLS_SPECIFIC_ROT=False
LANE = 128         # lane width of the padded output slabs
NEG_PAD = -1e30    # finite "minus infinity" for padded cls lanes


def _heads_kernel(x_ref, w_ref, b_ref, cls_score_ref, cls_ref, rot_ref):
    """Fused heads: one bf16 matmul (f32 acc) + softmax + quaternion L2 norm.

    x_ref:  (TM, D)        bf16
    w_ref:  (D, 2*LANE)    bf16   [cls cols 0:34 | -pad- | rot cols 128:132 | -pad-]
    b_ref:  (1, 2*LANE)    f32    (padded cls lanes = -1e30, padded rot lanes = 0)
    outputs (all f32, lane-dense):
      cls_score_ref (TM, LANE), cls_ref (TM, LANE), rot_ref (TM, LANE)
    """
    # Single MXU pass for both heads, f32 accumulation, f32 epilogue.
    out = jnp.dot(x_ref[...], w_ref[...], preferred_element_type=jnp.float32)
    out = out + b_ref[...]                       # (TM, 256) f32

    cls_slab = out[:, :LANE]                     # aligned 128-lane slice
    rot_slab = out[:, LANE:]                     # aligned 128-lane slice

    # cls_score (padded lanes carry -1e30; sliced away in the wrapper).
    cls_score_ref[...] = cls_slab

    # Softmax over all 128 lanes: padded lanes are -1e30 -> exp == 0 -> exact.
    m = jnp.max(cls_slab, axis=-1, keepdims=True)
    e = jnp.exp(cls_slab - m)
    denom = jnp.sum(e, axis=-1, keepdims=True)
    cls_ref[...] = e * pl.reciprocal(denom, approx=False)

    # F.normalize(p=2, dim=1): x / max(||x||, 1e-12). Padded lanes are exactly 0.
    sumsq = jnp.sum(rot_slab * rot_slab, axis=-1, keepdims=True)
    inv_norm = lax.rsqrt(jnp.maximum(sumsq, 1e-24))   # == 1 / max(||x||, 1e-12)
    rot_ref[...] = rot_slab * inv_norm


def _round_up(v, m):
    return ((v + m - 1) // m) * m


def fast_rcnn_outputs_car_cls_rot_forward(x, params):
    """Wrapper: squeeze NCHW -> (N, D), pack/pad params, run the fused kernel."""
    if x.ndim == 4:
        # PyTorch: x.squeeze(3).squeeze(2)  (H == W == 1)
        x = x.reshape(x.shape[0], x.shape[1])

    n, d = x.shape
    wc = params["cls_score_w"]                    # (D, C)
    bc = params["cls_score_b"].reshape(1, -1)     # (1, C)
    wr = params["rot_pred_w"]                     # (D, R)
    br = params["rot_pred_b"].reshape(1, -1)      # (1, R)
    c = wc.shape[1]
    r = wr.shape[1]

    # ---- fused, lane-padded weight / bias: [cls | pad | rot | pad] -> width 256 ----
    w_cat = jnp.zeros((d, 2 * LANE), jnp.float32)
    w_cat = w_cat.at[:, :c].set(wc)
    w_cat = w_cat.at[:, LANE:LANE + r].set(wr)
    b_cat = jnp.zeros((1, 2 * LANE), jnp.float32)
    b_cat = b_cat.at[:, :c].set(bc)
    b_cat = b_cat.at[:, c:LANE].set(NEG_PAD)      # padded cls lanes -> softmax-exact
    b_cat = b_cat.at[:, LANE:LANE + r].set(br)    # padded rot lanes stay 0 -> norm-exact

    # bf16 matmul inputs, f32 accumulation/epilogue.
    x_bf = x.astype(jnp.bfloat16)
    w_bf = w_cat.astype(jnp.bfloat16)

    # ---- row tiling: small N -> single padded block; large N -> 256-row tiles ----
    if n <= 256:
        tm = max(8, _round_up(n, 8))
        n_pad = tm
    else:
        tm = 256
        n_pad = _round_up(n, tm)
    if n_pad != n:
        x_bf = jnp.pad(x_bf, ((0, n_pad - n), (0, 0)))

    grid = (n_pad // tm,)

    out_shapes = (
        jax.ShapeDtypeStruct((n_pad, LANE), jnp.float32),   # cls_score (padded)
        jax.ShapeDtypeStruct((n_pad, LANE), jnp.float32),   # cls = softmax (padded)
        jax.ShapeDtypeStruct((n_pad, LANE), jnp.float32),   # rot_pred (padded)
    )

    grid_spec = pltpu.PrefetchScalarGridSpec(
        num_scalar_prefetch=0,
        grid=grid,
        in_specs=[
            pl.BlockSpec((tm, d), lambda i: (i, 0)),              # x: streamed per tile
            pl.BlockSpec((d, 2 * LANE), lambda i: (0, 0)),        # fused W: resident
            pl.BlockSpec((1, 2 * LANE), lambda i: (0, 0)),        # fused b: resident
        ],
        out_specs=[
            pl.BlockSpec((tm, LANE), lambda i: (i, 0)),
            pl.BlockSpec((tm, LANE), lambda i: (i, 0)),
            pl.BlockSpec((tm, LANE), lambda i: (i, 0)),
        ],
    )

    cost = pl.CostEstimate(
        flops=2 * n_pad * d * 2 * LANE,
        transcendentals=n_pad * LANE,                     # exp in the softmax
        bytes_accessed=(x_bf.size * 2 + w_bf.size * 2 + b_cat.size * 4
                        + 3 * n_pad * LANE * 4),
    )

    cls_score_p, cls_p, rot_p = pl.pallas_call(
        _heads_kernel,
        out_shape=out_shapes,
        grid_spec=grid_spec,
        compiler_params=pltpu.CompilerParams(
            dimension_semantics=("parallel",)),
        cost_estimate=cost,
    )(x_bf, w_bf, b_cat)

    # Slice the lane-dense slabs back to the module's logical widths.
    return (cls_score_p[:n, :c], cls_p[:n, :c], rot_p[:n, :r])


def init_params(key, dim_in):
    """Deterministic init matching the module's _init_weights:
       cls_score.weight ~ N(0, 0.01), bias = 0
       rot_pred.weight  ~ N(0, 0.001), bias = 0
       (stored transposed as (dim_in, out) for the kernel)."""
    k1, k2 = jax.random.split(key)
    wc = jax.random.normal(k1, (dim_in, NUMBER_CARS), jnp.float32) * 0.01
    bc = jnp.zeros((1, NUMBER_CARS), jnp.float32)
    wr = jax.random.normal(k2, (dim_in, ROT_DIM), jnp.float32) * 0.001
    br = jnp.zeros((1, ROT_DIM), jnp.float32)
    return {"cls_score_w": wc, "cls_score_b": bc,
            "rot_pred_w": wr, "rot_pred_b": br}


if __name__ == "__main__":
    key = jax.random.PRNGKey(0)
    k_x, k_p = jax.random.split(key)

    N, DIM_IN = 8, 32
    # NCHW input with singleton spatial dims, as the PyTorch forward expects.
    x = jax.random.normal(k_x, (N, DIM_IN, 1, 1), jnp.float32)
    params = init_params(k_p, DIM_IN)

    cls_score, cls, rot_pred = fast_rcnn_outputs_car_cls_rot_forward(x, params)
    jax.block_until_ready((cls_score, cls, rot_pred))

    # Pure-JAX reference on the same bf16-rounded inputs (f32 math), so the check
    # isolates kernel correctness from the intentional bf16 input quantization.
    x2 = x.reshape(N, DIM_IN).astype(jnp.bfloat16).astype(jnp.float32)
    wc = params["cls_score_w"].astype(jnp.bfloat16).astype(jnp.float32)
    wr = params["rot_pred_w"].astype(jnp.bfloat16).astype(jnp.float32)
    ref_score = x2 @ wc + params["cls_score_b"]
    ref_cls = jax.nn.softmax(ref_score, axis=1)
    ref_rot = x2 @ wr + params["rot_pred_b"]
    ref_rot = ref_rot / jnp.maximum(
        jnp.linalg.norm(ref_rot, axis=1, keepdims=True), 1e-12)

    assert cls_score.shape == (N, NUMBER_CARS)
    assert cls.shape == (N, NUMBER_CARS)
    assert rot_pred.shape == (N, ROT_DIM)
    assert jnp.allclose(cls_score, ref_score, atol=1e-4, rtol=1e-4)
    assert jnp.allclose(cls, ref_cls, atol=1e-4, rtol=1e-4)
    assert jnp.allclose(rot_pred, ref_rot, atol=1e-4, rtol=1e-4)

    print("KERNEL_OK")
</pallas_src>

<mosaic_0001>
module attributes {stable_mosaic.version = 11 : i64} {
  func.func @_heads_kernel(%arg0: i32, %arg1: memref<8x32xbf16, #tpu.memory_space<vmem>>, %arg2: memref<32x256xbf16, #tpu.memory_space<vmem>>, %arg3: memref<1x256xf32, #tpu.memory_space<vmem>>, %arg4: memref<8x128xf32, #tpu.memory_space<vmem>>, %arg5: memref<8x128xf32, #tpu.memory_space<vmem>>, %arg6: memref<8x128xf32, #tpu.memory_space<vmem>>) attributes {dimension_semantics = [#tpu.dimension_semantics<parallel>], iteration_bounds = array<i64: 1>, scalar_prefetch = 0 : i64, scratch_operands = 0 : i64, tpu.core_type = #tpu.core_type<tc>, window_params = [{transform_indices = @transform_0, window_bounds = array<i64: 8, 32>}, {pipeline_mode = #tpu.pipeline_mode<synchronous>, transform_indices = @transform_1, window_bounds = array<i64: 32, 256>}, {pipeline_mode = #tpu.pipeline_mode<synchronous>, transform_indices = @transform_2, window_bounds = array<i64: 1, 256>}, {transform_indices = @transform_3, window_bounds = array<i64: 8, 128>}, {transform_indices = @transform_4, window_bounds = array<i64: 8, 128>}, {transform_indices = @transform_5, window_bounds = array<i64: 8, 128>}]} {
    %c0 = arith.constant 0 : index
    %c0_0 = arith.constant 0 : index
    %0 = vector.load %arg1[%c0, %c0_0] : memref<8x32xbf16, #tpu.memory_space<vmem>>, vector<8x32xbf16>
    %c0_1 = arith.constant 0 : index
    %c0_2 = arith.constant 0 : index
    %1 = vector.load %arg2[%c0_1, %c0_2] : memref<32x256xbf16, #tpu.memory_space<vmem>>, vector<32x256xbf16>
    %cst = arith.constant dense<0.000000e+00> : vector<8x256xf32>
    %2 = tpu.matmul %0, %1, %cst {dimension_numbers = #tpu.dot_dimension_numbers<[1], [0], [0], [1], [0, 0, 1, 1], [], []>} : vector<8x32xbf16>, vector<32x256xbf16>, vector<8x256xf32> -> vector<8x256xf32>
    %c0_3 = arith.constant 0 : index
    %c0_4 = arith.constant 0 : index
    %3 = vector.load %arg3[%c0_3, %c0_4] : memref<1x256xf32, #tpu.memory_space<vmem>>, vector<1x256xf32>
    %4 = vector.broadcast %3 : vector<1x256xf32> to vector<8x256xf32>
    %5 = arith.addf %2, %4 : vector<8x256xf32>
    %6 = vector.extract_strided_slice %5 {offsets = [0, 0], sizes = [8, 128], strides = [1, 1]} : vector<8x256xf32> to vector<8x128xf32>
    %7 = vector.extract_strided_slice %5 {offsets = [0, 128], sizes = [8, 128], strides = [1, 1]} : vector<8x256xf32> to vector<8x128xf32>
    %c0_5 = arith.constant 0 : index
    %c0_6 = arith.constant 0 : index
    %8 = vector.load %arg4[%c0_5, %c0_6] : memref<8x128xf32, #tpu.memory_space<vmem>>, vector<8x128xf32>
    tpu.vector_store %arg4[%c0_5, %c0_6], %6 {strides = array<i32>} : memref<8x128xf32, #tpu.memory_space<vmem>>, vector<8x128xf32>,
    %cst_7 = arith.constant dense<0xFF800000> : vector<8xf32>
    %9 = vector.multi_reduction <maximumf>, %6, %cst_7 [1] : vector<8x128xf32> to vector<8xf32>
    %10 = vector.shape_cast %9 : vector<8xf32> to vector<8x1xf32>
    %11 = vector.broadcast %10 : vector<8x1xf32> to vector<8x128xf32>
    %12 = arith.subf %6, %11 : vector<8x128xf32>
    %13 = math.exp %12 : vector<8x128xf32>
    %cst_8 = arith.constant dense<0.000000e+00> : vector<8xf32>
    %14 = vector.multi_reduction <add>, %13, %cst_8 [1] : vector<8x128xf32> to vector<8xf32>
    %15 = vector.shape_cast %14 : vector<8xf32> to vector<8x1xf32>
    %16 = tpu.reciprocal %15 : vector<8x1xf32> -> vector<8x1xf32>
    %17 = vector.broadcast %16 : vector<8x1xf32> to vector<8x128xf32>
    %18 = arith.mulf %13, %17 : vector<8x128xf32>
    %c0_9 = arith.constant 0 : index
    %c0_10 = arith.constant 0 : index
    %19 = vector.load %arg5[%c0_9, %c0_10] : memref<8x128xf32, #tpu.memory_space<vmem>>, vector<8x128xf32>
    tpu.vector_store %arg5[%c0_9, %c0_10], %18 {strides = array<i32>} : memref<8x128xf32, #tpu.memory_space<vmem>>, vector<8x128xf32>,
    %20 = arith.mulf %7, %7 : vector<8x128xf32>
    %cst_11 = arith.constant dense<0.000000e+00> : vector<8xf32>
    %21 = vector.multi_reduction <add>, %20, %cst_11 [1] : vector<8x128xf32> to vector<8xf32>
    %22 = vector.shape_cast %21 : vector<8xf32> to vector<8x1xf32>
    %cst_12 = arith.constant 1.000000e-24 : f32
    %23 = vector.broadcast %cst_12 : f32 to vector<8x1xf32>
    %24 = arith.maximumf %22, %23 : vector<8x1xf32>
    %25 = math.rsqrt %24 : vector<8x1xf32>
    %26 = vector.broadcast %25 : vector<8x1xf32> to vector<8x128xf32>
    %27 = arith.mulf %7, %26 : vector<8x128xf32>
    %c0_13 = arith.constant 0 : index
    %c0_14 = arith.constant 0 : index
    %28 = vector.load %arg6[%c0_13, %c0_14] : memref<8x128xf32, #tpu.memory_space<vmem>>, vector<8x128xf32>
    tpu.vector_store %arg6[%c0_13, %c0_14], %27 {strides = array<i32>} : memref<8x128xf32, #tpu.memory_space<vmem>>, vector<8x128xf32>,
    return
  }
  func.func @transform_0(%arg0: i32) -> (i32, i32) {
    %c0_i32 = arith.constant 0 : i32
    %c0_i32_0 = arith.constant 0 : i32
    return %arg0, %c0_i32 : i32, i32
  }
  func.func @transform_1(%arg0: i32) -> (i32, i32) {
    %c0_i32 = arith.constant 0 : i32
    %c0_i32_0 = arith.constant 0 : i32
    %c0_i32_1 = arith.constant 0 : i32
    return %c0_i32, %c0_i32_0 : i32, i32
  }
  func.func @transform_2(%arg0: i32) -> (i32, i32) {
    %c0_i32 = arith.constant 0 : i32
    %c0_i32_0 = arith.constant 0 : i32
    %c0_i32_1 = arith.constant 0 : i32
    return %c0_i32, %c0_i32_0 : i32, i32
  }
  func.func @transform_3(%arg0: i32) -> (i32, i32) {
    %c0_i32 = arith.constant 0 : i32
    %c0_i32_0 = arith.constant 0 : i32
    return %arg0, %c0_i32 : i32, i32
  }
  func.func @transform_4(%arg0: i32) -> (i32, i32) {
    %c0_i32 = arith.constant 0 : i32
    %c0_i32_0 = arith.constant 0 : i32
    return %arg0, %c0_i32 : i32, i32
  }
  func.func @transform_5(%arg0: i32) -> (i32, i32) {
    %c0_i32 = arith.constant 0 : i32
    %c0_i32_0 = arith.constant 0 : i32
    return %arg0, %c0_i32 : i32, i32
  }
}

</mosaic_0001>

<llo_original>
// kernel: tpu_custom_call.1
$region0: #{tpu_custom_call.1}
  #allocation0 [shape = 'u32[]', space=smem, size = 0x4, offset = 0x4, fixed_abs, tag = 'smem constant byte address 0x4 - core index']
  #allocation1 [shape = 'u32[144,128]{1,0:T(1,128)}', space=vmem, size = 0x12000, scoped, tag = 'internal scratch']
  %s0 = inlined_call_operand.hbm [shape: bf16[8,32], index: 0, kind: input, shape index: {}]
  %s1 = inlined_call_operand.hbm [shape: bf16[32,256], index: 1, kind: input, shape index: {}]
  %s2 = inlined_call_operand.vmem [shape: f32[1,256], index: 2, kind: input, shape index: {}]
  %s3 = inlined_call_operand.hbm [shape: f32[8,128], index: 3, kind: output, shape index: {0}]
  %s4 = inlined_call_operand.hbm [shape: f32[8,128], index: 4, kind: output, shape index: {1}]
  %s5 = inlined_call_operand.hbm [shape: f32[8,128], index: 5, kind: output, shape index: {2}]
  %6 = xla_tuple %s3, %s4, %s5
  %s7 = sld [smem:[#allocation0]]
  $region46: #{tpu_custom_call.1} parent=0
    _
  %s9 = ssub.s32 1, %s7
  %s10 = scalar_select 0, %s9, %s7
  $region1: #{tpu_custom_call.1} parent=0
    #allocation2 [shape = 'u8[2048]{0}', space=vmem, size = 0x800, scoped, tag = 'input window, operand 0, single buffered']
    #allocation3 [shape = 's32[1]{0}', space=sflag, size = 0x4, scoped, tag = 'scoped memory for tpu_custom_call.1']
    #allocation4 [shape = 's32[1]{0}', space=sflag, size = 0x4, scoped, tag = 'scoped memory for tpu_custom_call.1']
    #allocation5 [shape = 'u8[16384]{0}', space=vmem, size = 0x4000, scoped, tag = 'input window, operand 1, single buffered']
    #allocation6 [shape = 's32[1]{0}', space=sflag, size = 0x4, scoped, tag = 'scoped memory for tpu_custom_call.1']
    #allocation7 [shape = 'u8[4096]{0}', space=vmem, size = 0x1000, scoped, tag = 'output window, operand 0, single buffered']
    #allocation8 [shape = 'u8[4096]{0}', space=vmem, size = 0x1000, scoped, tag = 'output window, operand 1, single buffered']
    #allocation9 [shape = 's32[1]{0}', space=sflag, size = 0x4, scoped, tag = 'scoped memory for tpu_custom_call.1']
    #allocation10 [shape = 'u8[4096]{0}', space=vmem, size = 0x1000, scoped, tag = 'output window, operand 2, single buffered']
    %11 = vsyncpa [#allocation3], 0
    %12 = vsyncpa [#allocation6], 0
    %13 = vsyncpa [#allocation4], 0
    %14 = vsyncpa [#allocation9], 0
    // Predicated region
    $region2: #{tpu_custom_call.1} parent=1 // pred_check
      _
    $region3: #{tpu_custom_call.1} parent=1 // pred_check_branch
      %16 = sbr.rel (0) target = $region5
    $region4: #{tpu_custom_call.1} parent=1 // pred_region
      %s18 = ssub.s32 64, 64
      %19 = vsyncadd [#allocation3], %s18
      %s21 = sshll.u32 [#allocation2], 4
      %s22 = int_to_ptr.vmem [resolvable:$true] %s21
      %24 = dma.hbm_to_vmem [thread:$0]  %s0, 64, %s22, [#allocation3]
    $region5: #{tpu_custom_call.1} parent=1 // pred_fallthru
      _
    // Predicated region
    $region6: #{tpu_custom_call.1} parent=1 // pred_check
      _
    $region7: #{tpu_custom_call.1} parent=1 // pred_check_branch
      %26 = sbr.rel (0) target = $region9
    $region8: #{tpu_custom_call.1} parent=1 // pred_region
      %s28 = ssub.s32 512, 512
      %29 = vsyncadd [#allocation6], %s28
      %s30 = sshll.u32 [#allocation5], 4
      %s31 = int_to_ptr.vmem [resolvable:$true] %s30
      %36 = dma.hbm_to_vmem [thread:$0]  %s1, 512, %s31, [#allocation6], 128, 128, 8
    $region9: #{tpu_custom_call.1} parent=1 // pred_fallthru
      _
    // Predicated region
    $region10: #{tpu_custom_call.1} parent=1 // pred_check
      _
    $region11: #{tpu_custom_call.1} parent=1 // pred_check_branch
      %38 = sbr.rel (0) target = $region13
    $region12: #{tpu_custom_call.1} parent=1 // pred_region
      _
    $region13: #{tpu_custom_call.1} parent=1 // pred_fallthru
      _
    // Predicated region
    $region14: #{tpu_custom_call.1} parent=1 // pred_check
      _
    $region15: #{tpu_custom_call.1} parent=1 // pred_check_branch
      %40 = sbr.rel (0) target = $region17
    $region16: #{tpu_custom_call.1} parent=1 // pred_region
      %41 = dma.done [#allocation3], 64
    $region17: #{tpu_custom_call.1} parent=1 // pred_fallthru
      _
    // Predicated region
    $region18: #{tpu_custom_call.1} parent=1 // pred_check
      _
    $region19: #{tpu_custom_call.1} parent=1 // pred_check_branch
      %43 = sbr.rel (0) target = $region21
    $region20: #{tpu_custom_call.1} parent=1 // pred_region
      %44 = dma.done [#allocation6], 512
    $region21: #{tpu_custom_call.1} parent=1 // pred_fallthru
      _
    %v46 = vld [vmem:[#allocation2] sm:$0xf]
    %v47 = vld [vmem:[#allocation5] sm:$0xff]
    %v48 = vld [vmem:[#allocation5 + $0x8] sm:$0xff]
    %v49 = vld [vmem:[#allocation5 + $0x10] sm:$0xff]
    %v50 = vld [vmem:[#allocation5 + $0x18] sm:$0xff]
    %v51 = vld [vmem:[%s2] sm:$0x3]
    %v53 = vlaneseq
    %v54 = vshrl.u32 %v53, 7
    %v55 = vsub.s32 0, %v54
    %v56 = vrot.slane %v51, %v55
    %v57 = vlaneseq
    %v58 = vshrl.u32 %v57, 7
    %v59 = vsub.s32 1, %v58
    %v60 = vrot.slane %v51, %v59
    %v67 = vunpack.c.l.b16 %v47
    %v68 = vunpack.c.h.b16 %v47
    %v69 = vunpack.c.l.b16 %v48
    %v70 = vunpack.c.h.b16 %v48
    %v71 = vunpack.c.l.b16 %v49
    %v72 = vunpack.c.h.b16 %v49
    %v73 = vunpack.c.l.b16 %v50
    %v74 = vunpack.c.h.b16 %v50
    %v75 = vpack.c.b16 %v69, %v67
    %v76 = vpack.c.b16 %v70, %v68
    %v77 = vpack.c.b16 %v73, %v71
    %v78 = vpack.c.b16 %v74, %v72
    %vm83 = vcmask 261120
    %v85 = vsel %vm83, %v46, 0
    %87 = vmatprep.subr.bf16.mxu0 %v76
    %88 = vmatpush1.bf16.msra.mxu0 %v75
    %89 = vmatprep.subr.bf16.mxu0 %v78
    %90 = vmatpush1.bf16.msra.mxu0 %v77
    %91 = vmatprep.subr.bf16.mxu0 0
    %92 = vmatpush1.bf16.msra.mxu0 0
    %93 = vmatprep.subr.bf16.mxu0 0
    %94 = vmatpush1.bf16.msra.mxu0 0
    %95 = vmatprep.subr.bf16.mxu0 0
    %96 = vmatpush1.bf16.msra.mxu0 0
    %97 = vmatprep.subr.bf16.mxu0 0
    %98 = vmatpush1.bf16.msra.mxu0 0
    %99 = vmatprep.subr.bf16.mxu0 0
    %100 = vmatpush1.bf16.msra.mxu0 0
    %101 = vmatprep.subr.bf16.mxu0 0
    %102 = vmatpush1.bf16.msra.mxu0 0
    %103 = vmatprep.subr.bf16.mxu0 0
    %104 = vmatpush1.bf16.msra.mxu0 0
    %105 = vmatprep.subr.bf16.mxu0 0
    %106 = vmatpush1.bf16.msra.mxu0 0
    %107 = vmatprep.subr.bf16.mxu0 0
    %108 = vmatpush1.bf16.msra.mxu0 0
    %109 = vmatprep.subr.bf16.mxu0 0
    %110 = vmatpush1.bf16.msra.mxu0 0
    %111 = vmatprep.subr.bf16.mxu0 0
    %112 = vmatpush1.bf16.msra.mxu0 0
    %113 = vmatprep.subr.bf16.mxu0 0
    %114 = vmatpush1.bf16.msra.mxu0 0
    %115 = vmatprep.subr.bf16.mxu0 0
    %116 = vmatpush1.bf16.msra.mxu0 0
    %117 = vmatprep.subr.bf16.mxu0 0
    %118 = vmatpush1.bf16.msra.mxu0 0
    %119 = vmatprep.mubr.bf16.mxu0 0
    %120 = vmatmul.mubr.bf16.gmra.mrb[0].mxu0 %v85
    %v121 = vpop.f32.mrb[0].mxu0
    %v122 = vadd.f32 %v56, %v121
    %v123 = vpop.f32.mrb[0].mxu0
    %v124 = vadd.f32 %v60, %v123
    %v125 = vpop.f32.mrb[0].mxu0
    %v126 = vpop.f32.mrb[0].mxu0
    %127 = vdwg.mxu0
    %128 = vst [vmem:[#allocation7] sm:$0xff] %v122
    %129 = vmax.xlane.f32.xlu0 %v122
    %v130 = vpop.xlane.xlu0 %129
    %v131 = vsub.f32 %v122, %v130
    %v132 = vmul.f32 %v131, 1.442695
    %v133 = vpow.pop %v132
    %134 = vadd.xlane.f32.xlu0 %v133
    %v135 = vpop.xlane.xlu0 %134
    %v136 = vrcp.pop %v135
    %v137 = vmul.f32 %v133, %v136
    %138 = vst [vmem:[#allocation8] sm:$0xff] %v137
    %v139 = vmul.f32 %v124, %v124
    %140 = vadd.xlane.f32.xlu0 %v139
    %v141 = vpop.xlane.xlu0 %140
    %v142 = vmax.f32 %v141, 1e-24
    %v143 = vrsqrt.pop %v142
    %v144 = vmul.f32 %v124, %v143
    %145 = vst [vmem:[#allocation10] sm:$0xff] %v144
    // Predicated region
    $region22: #{tpu_custom_call.1} parent=1 // pred_check
      _
    $region23: #{tpu_custom_call.1} parent=1 // pred_check_branch
      %147 = sbr.rel (0) target = $region25
    $region24: #{tpu_custom_call.1} parent=1 // pred_region
      %s149 = ssub.s32 128, 128
      %150 = vsyncadd [#allocation4], %s149
      %s152 = sshll.u32 [#allocation7], 4
      %s153 = int_to_ptr.vmem [resolvable:$true] %s152
      %155 = dma.vmem_to_hbm [thread:$0]  %s153, 128, %s3, [#allocation4]
    $region25: #{tpu_custom_call.1} parent=1 // pred_fallthru
      _
    // Predicated region
    $region26: #{tpu_custom_call.1} parent=1 // pred_check
      _
    $region27: #{tpu_custom_call.1} parent=1 // pred_check_branch
      %157 = sbr.rel (0) target = $region29
    $region28: #{tpu_custom_call.1} parent=1 // pred_region
      %s159 = ssub.s32 128, 128
      %160 = vsyncadd [#allocation9], %s159
      %s162 = sshll.u32 [#allocation8], 4
      %s163 = int_to_ptr.vmem [resolvable:$true] %s162
      %165 = dma.vmem_to_hbm [thread:$0]  %s163, 128, %s4, [#allocation9]
    $region29: #{tpu_custom_call.1} parent=1 // pred_fallthru
      _
    // Predicated region
    $region30: #{tpu_custom_call.1} parent=1 // pred_check
      _
    $region31: #{tpu_custom_call.1} parent=1 // pred_check_branch
      %167 = sbr.rel (0) target = $region33
    $region32: #{tpu_custom_call.1} parent=1 // pred_region
      %s169 = ssub.s32 128, 128
      %170 = vsyncadd [#allocation9], %s169
      %s172 = sshll.u32 [#allocation10], 4
      %s173 = int_to_ptr.vmem [resolvable:$true] %s172
      %175 = dma.vmem_to_hbm [thread:$0]  %s173, 128, %s5, [#allocation9]
    $region33: #{tpu_custom_call.1} parent=1 // pred_fallthru
      _
    // Predicated region
    $region34: #{tpu_custom_call.1} parent=1 // pred_check
      _
    $region35: #{tpu_custom_call.1} parent=1 // pred_check_branch
      %177 = sbr.rel (0) target = $region37
    $region36: #{tpu_custom_call.1} parent=1 // pred_region
      %178 = dma.done [#allocation4], 128
    $region37: #{tpu_custom_call.1} parent=1 // pred_fallthru
      _
    // Predicated region
    $region38: #{tpu_custom_call.1} parent=1 // pred_check
      _
    $region39: #{tpu_custom_call.1} parent=1 // pred_check_branch
      %180 = sbr.rel (0) target = $region41
    $region40: #{tpu_custom_call.1} parent=1 // pred_region
      %181 = dma.done [#allocation9], 128
    $region41: #{tpu_custom_call.1} parent=1 // pred_fallthru
      _
    // Predicated region
    $region42: #{tpu_custom_call.1} parent=1 // pred_check
      _
    $region43: #{tpu_custom_call.1} parent=1 // pred_check_branch
      %183 = sbr.rel (0) target = $region45
    $region44: #{tpu_custom_call.1} parent=1 // pred_region
      %184 = dma.done [#allocation9], 128
    $region45: #{tpu_custom_call.1} parent=1 // pred_fallthru
      _
    %185 = vsyncpa [#allocation3], 1
    %186 = vsyncpa [#allocation6], 1
    %187 = vsyncpa [#allocation4], 1
    %188 = vsyncpa [#allocation9], 1

</llo_original>
